<compile_context>
chip_gen: v6e
topology: v6e:2x2x1
jax: 0.10.0
libtpu: 0.0.40
codegen_flags: <defaults>
</compile_context>

<pallas_src>
import functools

import jax
import jax.numpy as jnp
from jax import lax
from jax.experimental import pallas as pl
from jax.experimental.pallas import tpu as pltpu


def _round_up(x: int, m: int) -> int:
    return ((x + m - 1) // m) * m


def _round_down(x: int, m: int) -> int:
    return (x // m) * m


def _cdiv(a: int, b: int) -> int:
    return -(-a // b)


def _device_kind() -> str:
    try:
        return jax.devices()[0].device_kind.lower()
    except Exception:  # pragma: no cover
        return ""


@functools.lru_cache(maxsize=None)
def _tensorcores_per_chip() -> int:
    # v7x packs 2 TensorCores per chip; v5e / v6e have 1.
    return 2 if "v7" in _device_kind() else 1


@functools.lru_cache(maxsize=None)
def _block_bytes_target() -> int:
    # Keep each block's DMA time well above the ~0.35us per-grid-step cost:
    # ~4 MiB on v5e/v6e (~3us at 1.3-1.4 TB/s), ~8 MiB on v7x (3.2 TB/s HBM).
    return (8 << 20) if "v7" in _device_kind() else (4 << 20)


def _sublane_multiple(dtype) -> int:
    # Packed-dtype sublane tile: 8 rows (32-bit), 16 (16-bit), 32 (8-bit).
    return max(8, 32 // jnp.dtype(dtype).itemsize)


def _make_sum_kernel(*, num_splits, steps, row_block, cols, valid_rows, masked):
    """Streaming sum: one f32 partial sum per leading-axis split."""
    folds = row_block // 8

    def kernel(x_ref, o_ref, acc_ref):
        if num_splits > 1:
            split = pl.program_id(0)
            step = pl.program_id(1)
        else:
            split = 0
            step = pl.program_id(0)

        @pl.when(step == 0)
        def _init():
            acc_ref[...] = jnp.zeros_like(acc_ref)

        x = x_ref[...].astype(jnp.float32)
        if masked:
            # Grid coverage overhangs the slab: zero rows past the valid end
            # (out-of-bounds block contents are unspecified, so mask them).
            start_row = (split * steps + step) * row_block
            row_ids = lax.broadcasted_iota(jnp.int32, (row_block, 1), 0)
            x = jnp.where(start_row + row_ids < valid_rows, x, 0.0)

        # Fold the block into the small (8, cols) accumulator: pure VPU adds,
        # no per-step XLU reduce, no full-block accumulator writeback.
        acc_ref[...] += x.reshape(folds, 8, cols).sum(axis=0)

        @pl.when(step == steps - 1)
        def _finalize():
            # Single cross-lane/sublane tree reduce, deferred to the last step.
            o_ref[0, 0] = jnp.sum(acc_ref[...])

    return kernel


def perplexity(target_log_probs: jax.Array) -> jax.Array:
    """exp(-mean(target_log_probs)) via a Pallas TPU streaming reduction."""
    x = jnp.asarray(target_log_probs)
    total_n = x.size
    if total_n == 0:
        raise ValueError("perplexity: input must have at least one element")
    flat = x.reshape(-1)
    itemsize = jnp.dtype(flat.dtype).itemsize
    sub = _sublane_multiple(flat.dtype)

    # Pick the widest lane-dense column count that keeps the reshape free
    # (no padded copy).  If nothing divides, stream the largest 512-column
    # prefix and reduce the <512-element ragged tail with plain XLA.
    cols = next((c for c in (512, 256, 128) if total_n % c == 0), 512)
    main_rows = total_n // cols
    main_n = main_rows * cols
    tail_n = total_n - main_n

    # Tiny inputs (< one packed sublane strip): a kernel launch is pure
    # overhead; a plain XLA reduction is optimal.
    if main_rows < sub:
        total = jnp.sum(flat.astype(jnp.float32))
        return jnp.exp(-(total / jnp.float32(total_n)))

    # Zero-copy slab: the slice is the identity when total_n % cols == 0.
    slab = flat if tail_n == 0 else flat[:main_n]
    x2d = slab.reshape(main_rows, cols)

    # ---- generation-aware launch geometry --------------------------------
    num_splits = _tensorcores_per_chip()
    if main_rows < sub * num_splits:
        num_splits = 1

    row_block_max = max(
        sub, _round_down(_block_bytes_target() // (cols * itemsize), sub))
    rows_per_split = _cdiv(main_rows, num_splits)
    row_block = min(row_block_max, _round_up(rows_per_split, sub))
    row_block = min(row_block, _round_down(main_rows, sub))  # never exceed slab
    steps = _cdiv(rows_per_split, row_block)
    coverage = num_splits * steps * row_block
    masked = coverage != main_rows

    kernel = _make_sum_kernel(
        num_splits=num_splits, steps=steps, row_block=row_block,
        cols=cols, valid_rows=main_rows, masked=masked)

    if num_splits > 1:
        grid = (num_splits, steps)
        in_spec = pl.BlockSpec((row_block, cols), lambda c, i: (c * steps + i, 0))
        out_spec = pl.BlockSpec((1, 1), lambda c, i: (c, 0),
                                memory_space=pltpu.SMEM)
        # Only CORE_PARALLEL actually shards grid steps across the 2 TCs/chip.
        dim_sem = (pltpu.CORE_PARALLEL, pltpu.ARBITRARY)
    else:
        grid = (steps,)
        in_spec = pl.BlockSpec((row_block, cols), lambda i: (i, 0))
        out_spec = pl.BlockSpec((1, 1), lambda i: (0, 0),
                                memory_space=pltpu.SMEM)
        dim_sem = ("arbitrary",)

    cost = pl.CostEstimate(
        flops=int(main_n),
        transcendentals=0,
        bytes_accessed=int(main_n * itemsize) + 4 * num_splits,
    )

    partials = pl.pallas_call(
        kernel,
        out_shape=jax.ShapeDtypeStruct((num_splits, 1), jnp.float32),
        grid_spec=pltpu.PrefetchScalarGridSpec(
            num_scalar_prefetch=0,
            grid=grid,
            in_specs=[in_spec],
            out_specs=out_spec,
            scratch_shapes=[pltpu.VMEM((8, cols), jnp.float32)],
        ),
        compiler_params=pltpu.CompilerParams(
            dimension_semantics=dim_sem,
            # Double-buffered input blocks (2 x <=8 MiB) + tiny accumulator:
            # 32 MiB >= the scoped default on every generation and well under
            # v7x's 64 MiB physical VMEM.
            vmem_limit_bytes=32 * 1024 * 1024,
        ),
        cost_estimate=cost,
    )(x2d)

    total = jnp.sum(partials)
    if tail_n:
        total = total + jnp.sum(flat[main_n:].astype(jnp.float32))
    # Result kept in float32 for accuracy regardless of input dtype.
    return jnp.exp(-(total / jnp.float32(total_n)))


if __name__ == "__main__":
    key = jax.random.PRNGKey(0)
    k1, k2, k3, k4, k5 = jax.random.split(key, 5)

    def _check(x, rtol=1e-5, atol=1e-5):
        out = jax.block_until_ready(perplexity(x))
        ref = jnp.exp(-jnp.mean(x.astype(jnp.float32)))
        assert jnp.allclose(out, ref, rtol=rtol, atol=atol), (x.shape, out, ref)

    # 1) Typical (batch, seq) target log-probs: zero-copy, unmasked Pallas path.
    _check(-jnp.abs(jax.random.normal(k1, (8, 512), dtype=jnp.float32)))

    # 2) Awkward shape: in-kernel row mask + plain-XLA ragged tail.
    _check(jax.nn.log_softmax(
        jax.random.normal(k2, (3, 47, 129), dtype=jnp.float32), axis=-1))

    # 3) Multi-step streaming accumulation (rows > one block) + row mask.
    _check(-jnp.abs(jax.random.normal(k3, (2080, 512), dtype=jnp.float32)))

    # 4) bf16 input stays bf16 in HBM (16-row packed sublane blocks).
    _check(-jnp.abs(jax.random.normal(k4, (4, 16, 128), dtype=jnp.bfloat16)),
           rtol=1e-3, atol=1e-3)

    # 5) Tiny input: pure-XLA fallback path.
    _check(-jnp.abs(jax.random.normal(k5, (3, 5, 7), dtype=jnp.float32)))

    print("KERNEL_OK")
</pallas_src>

<mosaic_0001>
module attributes {stable_mosaic.version = 11 : i64} {
  func.func @kernel(%arg0: i32, %arg1: memref<8x512xf32, #tpu.memory_space<vmem>>, %arg2: memref<1x1xf32, #tpu.memory_space<smem>>, %arg3: memref<8x512xf32, #tpu.memory_space<vmem>>) attributes {dimension_semantics = [#tpu.dimension_semantics<arbitrary>], iteration_bounds = array<i64: 1>, scalar_prefetch = 0 : i64, scratch_operands = 1 : i64, tpu.core_type = #tpu.core_type<tc>, window_params = [{transform_indices = @transform_0, window_bounds = array<i64: 8, 512>}, {transform_indices = @transform_1, window_bounds = array<i64: 1, 1>}]} {
    %c0_i32 = arith.constant 0 : i32
    %0 = arith.cmpi eq, %arg0, %c0_i32 : i32
    %1 = arith.extui %0 : i1 to i32
    %c0_i32_0 = arith.constant 0 : i32
    %2 = arith.cmpi ne, %1, %c0_i32_0 : i32
    scf.if %2 {
      %cst_8 = arith.constant 0.000000e+00 : f32
      %12 = vector.broadcast %cst_8 : f32 to vector<8x512xf32>
      %c0_9 = arith.constant 0 : index
      %c0_10 = arith.constant 0 : index
      %13 = vector.load %arg3[%c0_9, %c0_10] : memref<8x512xf32, #tpu.memory_space<vmem>>, vector<8x512xf32>
      tpu.vector_store %arg3[%c0_9, %c0_10], %12 {strides = array<i32>} : memref<8x512xf32, #tpu.memory_space<vmem>>, vector<8x512xf32>,
    } else {
    }
    %c0 = arith.constant 0 : index
    %c0_1 = arith.constant 0 : index
    %3 = vector.load %arg1[%c0, %c0_1] : memref<8x512xf32, #tpu.memory_space<vmem>>, vector<8x512xf32>
    %c0_2 = arith.constant 0 : index
    %c0_3 = arith.constant 0 : index
    %4 = vector.load %arg3[%c0_2, %c0_3] : memref<8x512xf32, #tpu.memory_space<vmem>>, vector<8x512xf32>
    %5 = vector.shape_cast %3 : vector<8x512xf32> to vector<1x8x512xf32>
    %cst = arith.constant dense<0.000000e+00> : vector<8x512xf32>
    %6 = vector.multi_reduction <add>, %5, %cst [0] : vector<1x8x512xf32> to vector<8x512xf32>
    %7 = arith.addf %4, %6 : vector<8x512xf32>
    %c0_4 = arith.constant 0 : index
    %c0_5 = arith.constant 0 : index
    %8 = vector.load %arg3[%c0_4, %c0_5] : memref<8x512xf32, #tpu.memory_space<vmem>>, vector<8x512xf32>
    tpu.vector_store %arg3[%c0_4, %c0_5], %7 {strides = array<i32>} : memref<8x512xf32, #tpu.memory_space<vmem>>, vector<8x512xf32>,
    %c0_i32_6 = arith.constant 0 : i32
    %9 = arith.cmpi eq, %arg0, %c0_i32_6 : i32
    %10 = arith.extui %9 : i1 to i32
    %c0_i32_7 = arith.constant 0 : i32
    %11 = arith.cmpi ne, %10, %c0_i32_7 : i32
    scf.if %11 {
      %c0_8 = arith.constant 0 : index
      %c0_9 = arith.constant 0 : index
      %12 = vector.load %arg3[%c0_8, %c0_9] : memref<8x512xf32, #tpu.memory_space<vmem>>, vector<8x512xf32>
      %13 = vector.shape_cast %12 : vector<8x512xf32> to vector<1x8x512xf32>
      %cst_10 = arith.constant dense<0.000000e+00> : vector<1xf32>
      %14 = vector.multi_reduction <add>, %13, %cst_10 [1, 2] : vector<1x8x512xf32> to vector<1xf32>
      %15 = vector.shape_cast %14 : vector<1xf32> to vector<1x1x1xf32>
      %16 = vector.extract %15[0, 0, 0] : f32 from vector<1x1x1xf32>
      %c0_11 = arith.constant 0 : index
      %c0_12 = arith.constant 0 : index
      %17 = memref.load %arg2[%c0_11, %c0_12] : memref<1x1xf32, #tpu.memory_space<smem>>
      memref.store %16, %arg2[%c0_11, %c0_12] : memref<1x1xf32, #tpu.memory_space<smem>>
    } else {
    }
    return
  }
  func.func @transform_0(%arg0: i32) -> (i32, i32) {
    %c0_i32 = arith.constant 0 : i32
    %c0_i32_0 = arith.constant 0 : i32
    return %arg0, %c0_i32 : i32, i32
  }
  func.func @transform_1(%arg0: i32) -> (i32, i32) {
    %c0_i32 = arith.constant 0 : i32
    %c0_i32_0 = arith.constant 0 : i32
    %c0_i32_1 = arith.constant 0 : i32
    return %c0_i32, %c0_i32_0 : i32, i32
  }
}

</mosaic_0001>

<llo_original>
// kernel: tpu_custom_call.1
$region0: #{tpu_custom_call.1}
  #allocation0 [shape = 'u32[]', space=smem, size = 0x4, offset = 0x4, fixed_abs, tag = 'smem constant byte address 0x4 - core index']
  #allocation1 [shape = 'u32[144,128]{1,0:T(1,128)}', space=vmem, size = 0x12000, scoped, tag = 'internal scratch']
  #allocation2 [shape = 'f32[8,512]{1,0:T(8,128)}', space=vmem, size = 0x4000, scoped, tag = 'scratch operand']
  %s0 = inlined_call_operand.hbm [shape: f32[8,512], index: 0, kind: input, shape index: {}]
  %s1 = inlined_call_operand.hbm [shape: f32[1,1], index: 1, kind: output, shape index: {}]
  %s2 = sld [smem:[#allocation0]]
  $region26: #{tpu_custom_call.1} parent=0
    _
  %s4 = ssub.s32 1, %s2
  %s5 = scalar_select 0, %s4, %s2
  $region1: #{tpu_custom_call.1} parent=0
    #allocation3 [shape = 'u8[16384]{0}', space=vmem, size = 0x4000, scoped, tag = 'input window, operand 0, single buffered']
    #allocation4 [shape = 's32[1]{0}', space=sflag, size = 0x4, scoped, tag = 'scoped memory for tpu_custom_call.1']
    #allocation5 [shape = 's32[1]{0}', space=sflag, size = 0x4, scoped, tag = 'scoped memory for tpu_custom_call.1']
    #allocation6 [shape = 'u8[512]{0}', space=smem, size = 0x200, scoped, tag = 'output window, operand 0, single buffered']
    %6 = vsyncpa [#allocation4], 0
    %7 = vsyncpa [#allocation5], 0
    // Predicated region
    $region2: #{tpu_custom_call.1} parent=1 // pred_check
      _
    $region3: #{tpu_custom_call.1} parent=1 // pred_check_branch
      %9 = sbr.rel (0) target = $region5
    $region4: #{tpu_custom_call.1} parent=1 // pred_region
      %s11 = ssub.s32 512, 512
      %12 = vsyncadd [#allocation4], %s11
      %s14 = sshll.u32 [#allocation3], 4
      %s15 = int_to_ptr.vmem [resolvable:$true] %s14
      %17 = dma.hbm_to_vmem [thread:$0]  %s0, 512, %s15, [#allocation4]
    $region5: #{tpu_custom_call.1} parent=1 // pred_fallthru
      _
    // Predicated region
    $region6: #{tpu_custom_call.1} parent=1 // pred_check
      _
    $region7: #{tpu_custom_call.1} parent=1 // pred_check_branch
      %19 = sbr.rel (0) target = $region9
    $region8: #{tpu_custom_call.1} parent=1 // pred_region
      %20 = dma.done [#allocation4], 512
    $region9: #{tpu_custom_call.1} parent=1 // pred_fallthru
      _
    %p21 = scmp.eq.s32.totalorder 0, 0
    // Predicated region
    $region10: #{tpu_custom_call.1} parent=1 // pred_check
      %p22 = pneg %p21
    $region11: #{tpu_custom_call.1} parent=1 // pred_check_branch
      %24 = sbr.rel (%p22) target = $region13
    $region12: #{tpu_custom_call.1} parent=1 // pred_region
      %25 = vst [vmem:[#allocation2] sm:$0xff] 0.0
      %26 = vst [vmem:[#allocation2 + $0x8] sm:$0xff] 0.0
      %27 = vst [vmem:[#allocation2 + $0x10] sm:$0xff] 0.0
      %28 = vst [vmem:[#allocation2 + $0x18] sm:$0xff] 0.0
    $region13: #{tpu_custom_call.1} parent=1 // pred_fallthru
      _
    %v29 = vld [vmem:[#allocation3] sm:$0xff]
    %v30 = vld [vmem:[#allocation3 + $0x8] sm:$0xff]
    %v31 = vld [vmem:[#allocation3 + $0x10] sm:$0xff]
    %v32 = vld [vmem:[#allocation3 + $0x18] sm:$0xff]
    %v33 = vld [vmem:[#allocation2] sm:$0xff]
    %v34 = vld [vmem:[#allocation2 + $0x8] sm:$0xff]
    %v35 = vld [vmem:[#allocation2 + $0x10] sm:$0xff]
    %v36 = vld [vmem:[#allocation2 + $0x18] sm:$0xff]
    %v37 = vadd.f32 %v29, 0.0
    %v38 = vadd.f32 %v30, 0.0
    %v39 = vadd.f32 %v31, 0.0
    %v40 = vadd.f32 %v32, 0.0
    %v41 = vadd.f32 %v33, %v37
    %v42 = vadd.f32 %v34, %v38
    %v43 = vadd.f32 %v35, %v39
    %v44 = vadd.f32 %v36, %v40
    %45 = vst [vmem:[#allocation2] sm:$0xff] %v41
    %46 = vst [vmem:[#allocation2 + $0x8] sm:$0xff] %v42
    %47 = vst [vmem:[#allocation2 + $0x10] sm:$0xff] %v43
    %48 = vst [vmem:[#allocation2 + $0x18] sm:$0xff] %v44
    // Predicated region
    $region14: #{tpu_custom_call.1} parent=1 // pred_check
      %p49 = pneg %p21
    $region15: #{tpu_custom_call.1} parent=1 // pred_check_branch
      %51 = sbr.rel (%p49) target = $region17
    $region16: #{tpu_custom_call.1} parent=1 // pred_region
      %v52 = vld [vmem:[#allocation2] sm:$0xff]
      %v53 = vld [vmem:[#allocation2 + $0x8] sm:$0xff]
      %v54 = vld [vmem:[#allocation2 + $0x10] sm:$0xff]
      %v55 = vld [vmem:[#allocation2 + $0x18] sm:$0xff]
      %v56 = vadd.f32 %v52, %v53
      %v57 = vadd.f32 %v56, %v54
      %v58 = vadd.f32 %v57, %v55
      %59 = vadd.xlane.f32.xlu0 %v58
      %v60 = vpop.xlane.xlu0 %59
      %v61 = vrot.slane %v60, 4
      %v62 = vadd.f32 %v60, %v61
      %v63 = vrot.slane %v62, 2
      %v64 = vadd.f32 %v62, %v63
      %v65 = vrot.slane %v64, 1
      %v66 = vadd.f32 %v64, %v65
      %s67 = vtos %v66
      %s68 = scalar_lea.smem [#allocation6], 0
      %69 = sst [smem:[%s68]] %s67
    $region17: #{tpu_custom_call.1} parent=1 // pred_fallthru
      _
    // Predicated region
    $region18: #{tpu_custom_call.1} parent=1 // pred_check
      _
    $region19: #{tpu_custom_call.1} parent=1 // pred_check_branch
      %71 = sbr.rel (0) target = $region21
    $region20: #{tpu_custom_call.1} parent=1 // pred_region
      %s73 = ssub.s32 16, 16
      %74 = vsyncadd [#allocation5], %s73
      %77 = dma.smem_to_hbm [#allocation6], 16, %s1, [#allocation5]
    $region21: #{tpu_custom_call.1} parent=1 // pred_fallthru
      _
    // Predicated region
    $region22: #{tpu_custom_call.1} parent=1 // pred_check
      _
    $region23: #{tpu_custom_call.1} parent=1 // pred_check_branch
      %79 = sbr.rel (0) target = $region25
    $region24: #{tpu_custom_call.1} parent=1 // pred_region
      %80 = dma.done [#allocation5], 16
    $region25: #{tpu_custom_call.1} parent=1 // pred_fallthru
      _
    %81 = sfence
    %82 = vsyncpa [#allocation4], 1
    %83 = vsyncpa [#allocation5], 1

</llo_original>
